<compile_context>
chip_gen: v5e
topology: v5e:2x2
jax: 0.10.0
libtpu: 0.0.40
codegen_flags: <defaults>
</compile_context>

<pallas_src>
import jax
import jax.numpy as jnp
from jax import lax
from jax.experimental import pallas as pl
from jax.experimental.pallas import tpu as pltpu


_LANES = 128


def _multi_module_kernel(params_ref, x_ref, y1_ref, y2_ref):
    # x_ref block: (R, 128) f32, interleaved: lane 2k = feature0, 2k+1 = feature1
    # of one batch row.  Pairs never straddle the 128-lane boundary.
    x = x_ref[...]

    lane = lax.broadcasted_iota(jnp.int32, x.shape, dimension=1)
    even = (lane & 1) == 0                     # feature-0 lanes

    def swap(v):
        # Partner feature of every (even, odd) lane pair.  Circular wraparound
        # lanes (0 and 127) are never selected, so the rotate is exact.
        right = pltpu.roll(v, shift=_LANES - 1, axis=1)   # v[i+1]
        left = pltpu.roll(v, shift=1, axis=1)             # v[i-1]
        return jnp.where(even, right, left)

    def affine(v, base):
        # y = v @ W + b per pair, computed directly in interleaved layout.
        # Params packed as [w00, w01, w10, w11, b0, b1] with W stored (in, out).
        w00 = params_ref[base + 0]
        w01 = params_ref[base + 1]
        w10 = params_ref[base + 2]
        w11 = params_ref[base + 3]
        b0 = params_ref[base + 4]
        b1 = params_ref[base + 5]
        w_own = jnp.where(even, w00, w11)      # multiplies the lane's own feature
        w_cross = jnp.where(even, w10, w01)    # multiplies the partner feature
        bias = jnp.where(even, b0, b1)
        return v * w_own + swap(v) * w_cross + bias

    def sigmoid(v):
        # single-EUP form of the logistic function
        return 0.5 * jnp.tanh(0.5 * v) + 0.5

    # ---- path 1: D -> A -> B ----
    # (D.b.a.l1, D.b.l1) fused -> sigmoid -> (A.l1, B.a.l1, B.l1) fused
    p = affine(x, 0)
    p = sigmoid(p)
    p = affine(p, 6)
    y1_ref[...] = p.astype(y1_ref.dtype)       # single lane/sublane-dense store

    # ---- path 2: C -> B -> D ----
    # C.l1 -> relu -> (B.a.l1, B.l1, D.b.a.l1, D.b.l1) fused -> sigmoid
    q = affine(x, 12)
    q = jnp.maximum(q, 0.0)
    q = affine(q, 18)
    y2_ref[...] = sigmoid(q).astype(y2_ref.dtype)


def _compose_affine(ws, bs):
    # Fold y = (...((x@W0 + b0)@W1 + b1)...) into a single (W, b).
    W, b = ws[0], bs[0]
    for wi, bi in zip(ws[1:], bs[1:]):
        W = W @ wi
        b = b @ wi + bi
    return W, b


def _pack_params(w1, b1, w2, b2):
    # path1: layers 0-1 fused, sigmoid, layers 2-4 fused
    W1a, B1a = _compose_affine([w1[0], w1[1]], [b1[0], b1[1]])
    W1b, B1b = _compose_affine([w1[2], w1[3], w1[4]], [b1[2], b1[3], b1[4]])
    # path2: layer 0, relu, layers 1-4 fused, sigmoid
    W2a, B2a = w2[0], b2[0]
    W2b, B2b = _compose_affine([w2[1], w2[2], w2[3], w2[4]],
                               [b2[1], b2[2], b2[3], b2[4]])
    parts = []
    for W, B in ((W1a, B1a), (W1b, B1b), (W2a, B2a), (W2b, B2b)):
        parts.append(W.reshape(-1))            # [w00, w01, w10, w11]
        parts.append(B.reshape(-1))            # [b0, b1]
    return jnp.concatenate(parts).astype(jnp.float32)   # (24,) -> SMEM


def _block_rows(n_rows, target):
    # Pick the block height: multiple of 8 (or the full extent when short),
    # capped at `target` (~0.5-2 MiB/array/step), and split into >= 2 grid
    # steps when possible so v7x's two TensorCores both get work.
    if n_rows <= 8:
        return n_rows                          # short block == full sublane extent
    half = -(-n_rows // 2)
    rows = min(target, -(-half // 8) * 8)
    return max(8, rows)


def main_with_multi_module_outputs(x, w1, b1, w2, b2, *, target_block_rows=2048):
    # x: (n, 2);  w*: (5, 2, 2) stored (layer, in, out);  b*: (5, 1, 2)
    n, feat = x.shape
    assert feat == 2
    params = _pack_params(w1, b1, w2, b2)

    # Row-major (n, 2) flattened IS the interleaved lane layout the kernel
    # wants: no transpose, no de-interleave copy on the host side.
    flat = x.reshape(-1).astype(jnp.float32)   # (2n,)
    total = flat.shape[0]
    n_rows = -(-total // _LANES)
    padded = n_rows * _LANES
    if padded != total:                        # tiny pad only for awkward n
        flat = jnp.pad(flat, (0, padded - total))
    xi = flat.reshape(n_rows, _LANES)

    rows = _block_rows(n_rows, target_block_rows)
    grid = (pl.cdiv(n_rows, rows),)            # partial last block: OOB masked

    data_spec = pl.BlockSpec((rows, _LANES), lambda i: (i, 0))
    smem_spec = pl.BlockSpec(memory_space=pltpu.MemorySpace.SMEM)

    y1i, y2i = pl.pallas_call(
        _multi_module_kernel,
        out_shape=(
            jax.ShapeDtypeStruct((n_rows, _LANES), jnp.float32),
            jax.ShapeDtypeStruct((n_rows, _LANES), jnp.float32),
        ),
        grid=grid,
        in_specs=[smem_spec, data_spec],
        out_specs=(data_spec, data_spec),
        compiler_params=pltpu.CompilerParams(
            dimension_semantics=("parallel",),
            vmem_limit_bytes=32 * 1024 * 1024,   # headroom for 3 arrays x 2 bufs
        ),
    )(params, xi)

    # Back to the module's (n, 2) layout (free reshape when no pad was needed).
    y1 = y1i.reshape(-1)[:total].reshape(n, 2)
    y2 = y2i.reshape(-1)[:total].reshape(n, 2)
    return y1, y2


def init_params(key):
    # Deterministic synthetic init mimicking nn.Linear's U(-1/sqrt(in), 1/sqrt(in)).
    bound = 1.0 / jnp.sqrt(2.0)
    keys = jax.random.split(key, 4)
    w1 = jax.random.uniform(keys[0], (5, 2, 2), jnp.float32, -bound, bound)
    b1 = jax.random.uniform(keys[1], (5, 1, 2), jnp.float32, -bound, bound)
    w2 = jax.random.uniform(keys[2], (5, 2, 2), jnp.float32, -bound, bound)
    b2 = jax.random.uniform(keys[3], (5, 1, 2), jnp.float32, -bound, bound)
    return w1, b1, w2, b2


def reference(x, w1, b1, w2, b2):
    # Pure-JAX per-layer reference of the same forward pass (no folding).
    y = x
    for i in range(5):
        y = y @ w1[i] + b1[i]
        if i == 1:
            y = jax.nn.sigmoid(y)
    z = x
    for i in range(5):
        z = z @ w2[i] + b2[i]
        if i == 0:
            z = jnp.maximum(z, 0.0)
    z = jax.nn.sigmoid(z)
    return y, z


if __name__ == "__main__":
    key = jax.random.PRNGKey(0)
    kp, kx = jax.random.split(key)
    w1, b1, w2, b2 = init_params(kp)

    run = jax.jit(main_with_multi_module_outputs)

    # batch=8: single short block; batch=600: pad + 2-step grid with a partial
    # last block; batch=4096: clean 2-step grid (both TCs on v7x).
    for batch in (8, 600, 4096):
        x = jax.random.normal(jax.random.fold_in(kx, batch), (batch, 2),
                              dtype=jnp.float32)
        y1, y2 = jax.block_until_ready(run(x, w1, b1, w2, b2))
        r1, r2 = reference(x, w1, b1, w2, b2)
        assert jnp.allclose(y1, r1, atol=2e-5), f"path1 mismatch at batch={batch}"
        assert jnp.allclose(y2, r2, atol=2e-5), f"path2 mismatch at batch={batch}"

    print("KERNEL_OK")
</pallas_src>

<mosaic_0001>
module attributes {stable_mosaic.version = 11 : i64} {
  func.func @_multi_module_kernel(%arg0: i32, %arg1: memref<24xf32, #tpu.memory_space<smem>>, %arg2: memref<1x128xf32, #tpu.memory_space<vmem>>, %arg3: memref<1x128xf32, #tpu.memory_space<vmem>>, %arg4: memref<1x128xf32, #tpu.memory_space<vmem>>) attributes {dimension_semantics = [#tpu.dimension_semantics<parallel>], iteration_bounds = array<i64: 1>, scalar_prefetch = 0 : i64, scratch_operands = 0 : i64, tpu.core_type = #tpu.core_type<tc>, window_params = [{transform_indices = @transform_0, window_bounds = array<i64: 24>}, {transform_indices = @transform_1, window_bounds = array<i64: 1, 128>}, {transform_indices = @transform_2, window_bounds = array<i64: 1, 128>}, {transform_indices = @transform_3, window_bounds = array<i64: 1, 128>}]} {
    %c0 = arith.constant 0 : index
    %c0_0 = arith.constant 0 : index
    %0 = vector.load %arg2[%c0, %c0_0] : memref<1x128xf32, #tpu.memory_space<vmem>>, vector<1x128xf32>
    %1 = tpu.iota {dimensions = array<i32: 1>} : vector<1x128xi32>
    %c1_i32 = arith.constant 1 : i32
    %2 = vector.broadcast %c1_i32 : i32 to vector<1x128xi32>
    %3 = arith.andi %1, %2 : vector<1x128xi32>
    %c0_i32 = arith.constant 0 : i32
    %4 = vector.broadcast %c0_i32 : i32 to vector<1x128xi32>
    %5 = arith.cmpi eq, %3, %4 : vector<1x128xi32>
    %c0_1 = arith.constant 0 : index
    %6 = memref.load %arg1[%c0_1] : memref<24xf32, #tpu.memory_space<smem>>
    %c1 = arith.constant 1 : index
    %7 = memref.load %arg1[%c1] : memref<24xf32, #tpu.memory_space<smem>>
    %c2 = arith.constant 2 : index
    %8 = memref.load %arg1[%c2] : memref<24xf32, #tpu.memory_space<smem>>
    %c3 = arith.constant 3 : index
    %9 = memref.load %arg1[%c3] : memref<24xf32, #tpu.memory_space<smem>>
    %c4 = arith.constant 4 : index
    %10 = memref.load %arg1[%c4] : memref<24xf32, #tpu.memory_space<smem>>
    %c5 = arith.constant 5 : index
    %11 = memref.load %arg1[%c5] : memref<24xf32, #tpu.memory_space<smem>>
    %12 = vector.broadcast %6 : f32 to vector<1x128xf32>
    %13 = vector.broadcast %9 : f32 to vector<1x128xf32>
    %14 = arith.select %5, %12, %13 : vector<1x128xi1>, vector<1x128xf32>
    %15 = vector.broadcast %8 : f32 to vector<1x128xf32>
    %16 = vector.broadcast %7 : f32 to vector<1x128xf32>
    %17 = arith.select %5, %15, %16 : vector<1x128xi1>, vector<1x128xf32>
    %18 = vector.broadcast %10 : f32 to vector<1x128xf32>
    %19 = vector.broadcast %11 : f32 to vector<1x128xf32>
    %20 = arith.select %5, %18, %19 : vector<1x128xi1>, vector<1x128xf32>
    %21 = arith.mulf %0, %14 : vector<1x128xf32>
    %c127_i32 = arith.constant 127 : i32
    %22 = tpu.dynamic_rotate %0 by %c127_i32 dim 1 : vector<1x128xf32>, i32 -> vector<1x128xf32>
    %c1_i32_2 = arith.constant 1 : i32
    %23 = tpu.dynamic_rotate %0 by %c1_i32_2 dim 1 : vector<1x128xf32>, i32 -> vector<1x128xf32>
    %24 = arith.select %5, %22, %23 : vector<1x128xi1>, vector<1x128xf32>
    %25 = arith.mulf %24, %17 : vector<1x128xf32>
    %26 = arith.addf %21, %25 : vector<1x128xf32>
    %27 = arith.addf %26, %20 : vector<1x128xf32>
    %cst = arith.constant 5.000000e-01 : f32
    %28 = vector.broadcast %cst : f32 to vector<1x128xf32>
    %29 = arith.mulf %28, %27 : vector<1x128xf32>
    %30 = math.tanh %29 : vector<1x128xf32>
    %cst_3 = arith.constant 5.000000e-01 : f32
    %31 = vector.broadcast %cst_3 : f32 to vector<1x128xf32>
    %32 = arith.mulf %31, %30 : vector<1x128xf32>
    %cst_4 = arith.constant 5.000000e-01 : f32
    %33 = vector.broadcast %cst_4 : f32 to vector<1x128xf32>
    %34 = arith.addf %32, %33 : vector<1x128xf32>
    %c6 = arith.constant 6 : index
    %35 = memref.load %arg1[%c6] : memref<24xf32, #tpu.memory_space<smem>>
    %c7 = arith.constant 7 : index
    %36 = memref.load %arg1[%c7] : memref<24xf32, #tpu.memory_space<smem>>
    %c8 = arith.constant 8 : index
    %37 = memref.load %arg1[%c8] : memref<24xf32, #tpu.memory_space<smem>>
    %c9 = arith.constant 9 : index
    %38 = memref.load %arg1[%c9] : memref<24xf32, #tpu.memory_space<smem>>
    %c10 = arith.constant 10 : index
    %39 = memref.load %arg1[%c10] : memref<24xf32, #tpu.memory_space<smem>>
    %c11 = arith.constant 11 : index
    %40 = memref.load %arg1[%c11] : memref<24xf32, #tpu.memory_space<smem>>
    %41 = vector.broadcast %35 : f32 to vector<1x128xf32>
    %42 = vector.broadcast %38 : f32 to vector<1x128xf32>
    %43 = arith.select %5, %41, %42 : vector<1x128xi1>, vector<1x128xf32>
    %44 = vector.broadcast %37 : f32 to vector<1x128xf32>
    %45 = vector.broadcast %36 : f32 to vector<1x128xf32>
    %46 = arith.select %5, %44, %45 : vector<1x128xi1>, vector<1x128xf32>
    %47 = vector.broadcast %39 : f32 to vector<1x128xf32>
    %48 = vector.broadcast %40 : f32 to vector<1x128xf32>
    %49 = arith.select %5, %47, %48 : vector<1x128xi1>, vector<1x128xf32>
    %50 = arith.mulf %34, %43 : vector<1x128xf32>
    %c127_i32_5 = arith.constant 127 : i32
    %51 = tpu.dynamic_rotate %34 by %c127_i32_5 dim 1 : vector<1x128xf32>, i32 -> vector<1x128xf32>
    %c1_i32_6 = arith.constant 1 : i32
    %52 = tpu.dynamic_rotate %34 by %c1_i32_6 dim 1 : vector<1x128xf32>, i32 -> vector<1x128xf32>
    %53 = arith.select %5, %51, %52 : vector<1x128xi1>, vector<1x128xf32>
    %54 = arith.mulf %53, %46 : vector<1x128xf32>
    %55 = arith.addf %50, %54 : vector<1x128xf32>
    %56 = arith.addf %55, %49 : vector<1x128xf32>
    %c0_7 = arith.constant 0 : index
    %c0_8 = arith.constant 0 : index
    %57 = vector.load %arg3[%c0_7, %c0_8] : memref<1x128xf32, #tpu.memory_space<vmem>>, vector<1x128xf32>
    tpu.vector_store %arg3[%c0_7, %c0_8], %56 {strides = array<i32>} : memref<1x128xf32, #tpu.memory_space<vmem>>, vector<1x128xf32>,
    %c12 = arith.constant 12 : index
    %58 = memref.load %arg1[%c12] : memref<24xf32, #tpu.memory_space<smem>>
    %c13 = arith.constant 13 : index
    %59 = memref.load %arg1[%c13] : memref<24xf32, #tpu.memory_space<smem>>
    %c14 = arith.constant 14 : index
    %60 = memref.load %arg1[%c14] : memref<24xf32, #tpu.memory_space<smem>>
    %c15 = arith.constant 15 : index
    %61 = memref.load %arg1[%c15] : memref<24xf32, #tpu.memory_space<smem>>
    %c16 = arith.constant 16 : index
    %62 = memref.load %arg1[%c16] : memref<24xf32, #tpu.memory_space<smem>>
    %c17 = arith.constant 17 : index
    %63 = memref.load %arg1[%c17] : memref<24xf32, #tpu.memory_space<smem>>
    %64 = vector.broadcast %58 : f32 to vector<1x128xf32>
    %65 = vector.broadcast %61 : f32 to vector<1x128xf32>
    %66 = arith.select %5, %64, %65 : vector<1x128xi1>, vector<1x128xf32>
    %67 = vector.broadcast %60 : f32 to vector<1x128xf32>
    %68 = vector.broadcast %59 : f32 to vector<1x128xf32>
    %69 = arith.select %5, %67, %68 : vector<1x128xi1>, vector<1x128xf32>
    %70 = vector.broadcast %62 : f32 to vector<1x128xf32>
    %71 = vector.broadcast %63 : f32 to vector<1x128xf32>
    %72 = arith.select %5, %70, %71 : vector<1x128xi1>, vector<1x128xf32>
    %73 = arith.mulf %0, %66 : vector<1x128xf32>
    %c127_i32_9 = arith.constant 127 : i32
    %74 = tpu.dynamic_rotate %0 by %c127_i32_9 dim 1 : vector<1x128xf32>, i32 -> vector<1x128xf32>
    %c1_i32_10 = arith.constant 1 : i32
    %75 = tpu.dynamic_rotate %0 by %c1_i32_10 dim 1 : vector<1x128xf32>, i32 -> vector<1x128xf32>
    %76 = arith.select %5, %74, %75 : vector<1x128xi1>, vector<1x128xf32>
    %77 = arith.mulf %76, %69 : vector<1x128xf32>
    %78 = arith.addf %73, %77 : vector<1x128xf32>
    %79 = arith.addf %78, %72 : vector<1x128xf32>
    %cst_11 = arith.constant 0.000000e+00 : f32
    %80 = vector.broadcast %cst_11 : f32 to vector<1x128xf32>
    %81 = arith.maximumf %79, %80 : vector<1x128xf32>
    %c18 = arith.constant 18 : index
    %82 = memref.load %arg1[%c18] : memref<24xf32, #tpu.memory_space<smem>>
    %c19 = arith.constant 19 : index
    %83 = memref.load %arg1[%c19] : memref<24xf32, #tpu.memory_space<smem>>
    %c20 = arith.constant 20 : index
    %84 = memref.load %arg1[%c20] : memref<24xf32, #tpu.memory_space<smem>>
    %c21 = arith.constant 21 : index
    %85 = memref.load %arg1[%c21] : memref<24xf32, #tpu.memory_space<smem>>
    %c22 = arith.constant 22 : index
    %86 = memref.load %arg1[%c22] : memref<24xf32, #tpu.memory_space<smem>>
    %c23 = arith.constant 23 : index
    %87 = memref.load %arg1[%c23] : memref<24xf32, #tpu.memory_space<smem>>
    %88 = vector.broadcast %82 : f32 to vector<1x128xf32>
    %89 = vector.broadcast %85 : f32 to vector<1x128xf32>
    %90 = arith.select %5, %88, %89 : vector<1x128xi1>, vector<1x128xf32>
    %91 = vector.broadcast %84 : f32 to vector<1x128xf32>
    %92 = vector.broadcast %83 : f32 to vector<1x128xf32>
    %93 = arith.select %5, %91, %92 : vector<1x128xi1>, vector<1x128xf32>
    %94 = vector.broadcast %86 : f32 to vector<1x128xf32>
    %95 = vector.broadcast %87 : f32 to vector<1x128xf32>
    %96 = arith.select %5, %94, %95 : vector<1x128xi1>, vector<1x128xf32>
    %97 = arith.mulf %81, %90 : vector<1x128xf32>
    %c127_i32_12 = arith.constant 127 : i32
    %98 = tpu.dynamic_rotate %81 by %c127_i32_12 dim 1 : vector<1x128xf32>, i32 -> vector<1x128xf32>
    %c1_i32_13 = arith.constant 1 : i32
    %99 = tpu.dynamic_rotate %81 by %c1_i32_13 dim 1 : vector<1x128xf32>, i32 -> vector<1x128xf32>
    %100 = arith.select %5, %98, %99 : vector<1x128xi1>, vector<1x128xf32>
    %101 = arith.mulf %100, %93 : vector<1x128xf32>
    %102 = arith.addf %97, %101 : vector<1x128xf32>
    %103 = arith.addf %102, %96 : vector<1x128xf32>
    %cst_14 = arith.constant 5.000000e-01 : f32
    %104 = vector.broadcast %cst_14 : f32 to vector<1x128xf32>
    %105 = arith.mulf %104, %103 : vector<1x128xf32>
    %106 = math.tanh %105 : vector<1x128xf32>
    %cst_15 = arith.constant 5.000000e-01 : f32
    %107 = vector.broadcast %cst_15 : f32 to vector<1x128xf32>
    %108 = arith.mulf %107, %106 : vector<1x128xf32>
    %cst_16 = arith.constant 5.000000e-01 : f32
    %109 = vector.broadcast %cst_16 : f32 to vector<1x128xf32>
    %110 = arith.addf %108, %109 : vector<1x128xf32>
    %c0_17 = arith.constant 0 : index
    %c0_18 = arith.constant 0 : index
    %111 = vector.load %arg4[%c0_17, %c0_18] : memref<1x128xf32, #tpu.memory_space<vmem>>, vector<1x128xf32>
    tpu.vector_store %arg4[%c0_17, %c0_18], %110 {strides = array<i32>} : memref<1x128xf32, #tpu.memory_space<vmem>>, vector<1x128xf32>,
    return
  }
  func.func @transform_0(%arg0: i32) -> i32 {
    %c0_i32 = arith.constant 0 : i32
    %c0_i32_0 = arith.constant 0 : i32
    return %c0_i32 : i32
  }
  func.func @transform_1(%arg0: i32) -> (i32, i32) {
    %c0_i32 = arith.constant 0 : i32
    %c0_i32_0 = arith.constant 0 : i32
    return %arg0, %c0_i32 : i32, i32
  }
  func.func @transform_2(%arg0: i32) -> (i32, i32) {
    %c0_i32 = arith.constant 0 : i32
    %c0_i32_0 = arith.constant 0 : i32
    return %arg0, %c0_i32 : i32, i32
  }
  func.func @transform_3(%arg0: i32) -> (i32, i32) {
    %c0_i32 = arith.constant 0 : i32
    %c0_i32_0 = arith.constant 0 : i32
    return %arg0, %c0_i32 : i32, i32
  }
}

</mosaic_0001>

<llo_original>
// kernel: main_with_multi_module_outputs.1
$region0: #{main_with_multi_module_outputs.1}
  #allocation0 [shape = 'u32[]', space=smem, size = 0x4, offset = 0x4, fixed_abs, tag = 'smem constant byte address 0x4 - core index']
  #allocation1 [shape = 'u32[72,128]{1,0:T(1,128)}', space=vmem, size = 0x9000, scoped, tag = 'internal scratch']
  %s0 = inlined_call_operand.vmem [shape: f32[24], index: 0, kind: input, shape index: {}]
  %s1 = inlined_call_operand.vmem [shape: f32[1,128], index: 1, kind: input, shape index: {}]
  %s2 = inlined_call_operand.vmem [shape: f32[1,128], index: 2, kind: output, shape index: {0}]
  %s3 = inlined_call_operand.vmem [shape: f32[1,128], index: 3, kind: output, shape index: {1}]
  %4 = xla_tuple %s2, %s3
  %s5 = sld [smem:[#allocation0]]
  $region30: #{main_with_multi_module_outputs.1} parent=0
    _
  %s7 = ssub.s32 1, %s5
  %s8 = scalar_select 0, %s7, %s5
  $region1: #{main_with_multi_module_outputs.1} parent=0
    #allocation2 [shape = 'u8[512]{0}', space=smem, size = 0x200, scoped, tag = 'input window, operand 0, single buffered']
    #allocation3 [shape = 's32[1]{0}', space=sflag, size = 0x4, scoped, tag = 'scoped memory for main_with_multi_module_outputs.1']
    %9 = vsyncpa [#allocation3], 0
    // Predicated region
    $region2: #{main_with_multi_module_outputs.1} parent=1 // pred_check
      _
    $region3: #{main_with_multi_module_outputs.1} parent=1 // pred_check_branch
      %11 = sbr.rel (0) target = $region5
    $region4: #{main_with_multi_module_outputs.1} parent=1 // pred_region
      %13 = vsyncadd [#allocation3], 0
      %s15 = sshll.u32 %s0, 4
      %s16 = int_to_ptr.vmem [resolvable:$true] %s15
      %18 = dma.vmem_to_smem %s16, 16, [#allocation2], [#allocation3]
    $region5: #{main_with_multi_module_outputs.1} parent=1 // pred_fallthru
      _
    // Predicated region
    $region6: #{main_with_multi_module_outputs.1} parent=1 // pred_check
      _
    $region7: #{main_with_multi_module_outputs.1} parent=1 // pred_check_branch
      %20 = sbr.rel (0) target = $region9
    $region8: #{main_with_multi_module_outputs.1} parent=1 // pred_region
      _
    $region9: #{main_with_multi_module_outputs.1} parent=1 // pred_fallthru
      _
    // Predicated region
    $region10: #{main_with_multi_module_outputs.1} parent=1 // pred_check
      _
    $region11: #{main_with_multi_module_outputs.1} parent=1 // pred_check_branch
      %22 = sbr.rel (0) target = $region13
    $region12: #{main_with_multi_module_outputs.1} parent=1 // pred_region
      %24 = dma.done [#allocation3], 16
    $region13: #{main_with_multi_module_outputs.1} parent=1 // pred_fallthru
      _
    %25 = sfence
    %v26 = vld [vmem:[%s1] sm:$0x1]
    %v27 = vlaneseq
    %v28 = vand.u32 %v27, 127
    %v29 = vand.u32 %v28, 1
    %vm30 = vcmp.eq.s32.totalorder %v29, 0
    %s31 = sld [smem:[#allocation2]]
    %s32 = sld [smem:[#allocation2 + $0x1]]
    %s33 = sld [smem:[#allocation2 + $0x2]]
    %s34 = sld [smem:[#allocation2 + $0x3]]
    %s35 = sld [smem:[#allocation2 + $0x4]]
    %s36 = sld [smem:[#allocation2 + $0x5]]
    %v37 = vstv %s31
    %v38 = vstv %s34
    %v39 = vsel %vm30, %v37, %v38
    %v40 = vstv %s33
    %v41 = vstv %s32
    %v42 = vsel %vm30, %v40, %v41
    %v43 = vstv %s35
    %v44 = vstv %s36
    %v45 = vsel %vm30, %v43, %v44
    %v46 = vmul.f32 %v26, %v39
    %47 = vrot.lane.b32.xlu0 %v26, 127
    %v48 = vpop.permute.xlu0 %47
    %49 = vrot.lane.b32.xlu0 %v26, 1
    %v50 = vpop.permute.xlu0 %49
    %v51 = vsel %vm30, %v48, %v50
    %v52 = vmul.f32 %v51, %v42
    %v53 = vadd.f32 %v46, %v52
    %v54 = vadd.f32 %v53, %v45
    %v55 = vmul.f32 %v54, 0.5
    %v56 = vtanh.pop %v55
    %v57 = vmul.f32 %v56, 0.5
    %v58 = vadd.f32 %v57, 0.5
    %s59 = sld [smem:[#allocation2 + $0x6]]
    %s60 = sld [smem:[#allocation2 + $0x7]]
    %s61 = sld [smem:[#allocation2 + $0x8]]
    %s62 = sld [smem:[#allocation2 + $0x9]]
    %s63 = sld [smem:[#allocation2 + $0xa]]
    %s64 = sld [smem:[#allocation2 + $0xb]]
    %v65 = vstv %s59
    %v66 = vstv %s62
    %v67 = vsel %vm30, %v65, %v66
    %v68 = vstv %s61
    %v69 = vstv %s60
    %v70 = vsel %vm30, %v68, %v69
    %v71 = vstv %s63
    %v72 = vstv %s64
    %v73 = vsel %vm30, %v71, %v72
    %v74 = vmul.f32 %v58, %v67
    %75 = vrot.lane.b32.xlu0 %v58, 127
    %v76 = vpop.permute.xlu0 %75
    %77 = vrot.lane.b32.xlu0 %v58, 1
    %v78 = vpop.permute.xlu0 %77
    %v79 = vsel %vm30, %v76, %v78
    %v80 = vmul.f32 %v79, %v70
    %v81 = vadd.f32 %v74, %v80
    %v82 = vadd.f32 %v81, %v73
    %83 = vst [vmem:[%s2] sm:$0x1] %v82
    %s84 = sld [smem:[#allocation2 + $0xc]]
    %s85 = sld [smem:[#allocation2 + $0xd]]
    %s86 = sld [smem:[#allocation2 + $0xe]]
    %s87 = sld [smem:[#allocation2 + $0xf]]
    %s88 = sld [smem:[#allocation2 + $0x10]]
    %s89 = sld [smem:[#allocation2 + $0x11]]
    %v90 = vstv %s84
    %v91 = vstv %s87
    %v92 = vsel %vm30, %v90, %v91
    %v93 = vstv %s86
    %v94 = vstv %s85
    %v95 = vsel %vm30, %v93, %v94
    %v96 = vstv %s88
    %v97 = vstv %s89
    %v98 = vsel %vm30, %v96, %v97
    %v99 = vmul.f32 %v26, %v92
    %v100 = vmul.f32 %v51, %v95
    %v101 = vadd.f32 %v99, %v100
    %v102 = vadd.f32 %v101, %v98
    %v103 = vmax.f32 %v102, 0.0
    %s104 = sld [smem:[#allocation2 + $0x12]]
    %s105 = sld [smem:[#allocation2 + $0x13]]
    %s106 = sld [smem:[#allocation2 + $0x14]]
    %s107 = sld [smem:[#allocation2 + $0x15]]
    %s108 = sld [smem:[#allocation2 + $0x16]]
    %s109 = sld [smem:[#allocation2 + $0x17]]
    %v110 = vstv %s104
    %v111 = vstv %s107
    %v112 = vsel %vm30, %v110, %v111
    %v113 = vstv %s106
    %v114 = vstv %s105
    %v115 = vsel %vm30, %v113, %v114
    %v116 = vstv %s108
    %v117 = vstv %s109
    %v118 = vsel %vm30, %v116, %v117
    %v119 = vmul.f32 %v103, %v112
    %120 = vrot.lane.b32.xlu0 %v103, 127
    %v121 = vpop.permute.xlu0 %120
    %122 = vrot.lane.b32.xlu0 %v103, 1
    %v123 = vpop.permute.xlu0 %122
    %v124 = vsel %vm30, %v121, %v123
    %v125 = vmul.f32 %v124, %v115
    %v126 = vadd.f32 %v119, %v125
    %v127 = vadd.f32 %v126, %v118
    %v128 = vmul.f32 %v127, 0.5
    %v129 = vtanh.pop %v128
    %v130 = vmul.f32 %v129, 0.5
    %v131 = vadd.f32 %v130, 0.5
    %132 = vst [vmem:[%s3] sm:$0x1] %v131
    // Predicated region
    $region14: #{main_with_multi_module_outputs.1} parent=1 // pred_check
      _
    $region15: #{main_with_multi_module_outputs.1} parent=1 // pred_check_branch
      %134 = sbr.rel (0) target = $region17
    $region16: #{main_with_multi_module_outputs.1} parent=1 // pred_region
      _
    $region17: #{main_with_multi_module_outputs.1} parent=1 // pred_fallthru
      _
    // Predicated region
    $region18: #{main_with_multi_module_outputs.1} parent=1 // pred_check
      _
    $region19: #{main_with_multi_module_outputs.1} parent=1 // pred_check_branch
      %136 = sbr.rel (0) target = $region21
    $region20: #{main_with_multi_module_outputs.1} parent=1 // pred_region
      _
    $region21: #{main_with_multi_module_outputs.1} parent=1 // pred_fallthru
      _
    // Predicated region
    $region22: #{main_with_multi_module_outputs.1} parent=1 // pred_check
      _
    $region23: #{main_with_multi_module_outputs.1} parent=1 // pred_check_branch
      %138 = sbr.rel (0) target = $region25
    $region24: #{main_with_multi_module_outputs.1} parent=1 // pred_region
      _
    $region25: #{main_with_multi_module_outputs.1} parent=1 // pred_fallthru
      _
    // Predicated region
    $region26: #{main_with_multi_module_outputs.1} parent=1 // pred_check
      _
    $region27: #{main_with_multi_module_outputs.1} parent=1 // pred_check_branch
      %140 = sbr.rel (0) target = $region29
    $region28: #{main_with_multi_module_outputs.1} parent=1 // pred_region
      _
    $region29: #{main_with_multi_module_outputs.1} parent=1 // pred_fallthru
      _
    %141 = vsyncpa [#allocation3], 1

</llo_original>
